<compile_context>
chip_gen: v7x
topology: tpu7x:2x2x1
jax: 0.10.0
libtpu: 0.0.40
codegen_flags: <defaults>
</compile_context>

<pallas_src>
import functools

import jax
import jax.numpy as jnp
from jax.experimental import pallas as pl
from jax.experimental.pallas import tpu as pltpu


def _conv_bn_kernel(patches_ref, w_ref, params_ref, out_ref):
    # patches_ref: (N, C_in*K, L_out)   w_ref: (C_out, C_in*K)
    # params_ref:  (C_out, 3) = [bias | gamma | beta] columns
    # out_ref:     (N, C_out, L_out)
    n, c_out, l_out = out_ref.shape

    w = w_ref[...]                       # (C_out, C_in*K)
    params = params_ref[...]             # (C_out, 3)
    bias = params[:, 0:1]                # (C_out, 1), broadcast along lanes
    gamma = params[:, 1:2]
    beta = params[:, 2:3]

    # Pass 1: conv-as-matmul (MXU) + bias + ReLU; accumulate independent
    # per-channel sum and sum-of-squares (both lane reductions, no serial
    # mean-then-subtract chain).
    s1 = jnp.zeros((c_out, 1), jnp.float32)
    s2 = jnp.zeros((c_out, 1), jnp.float32)
    for i in range(n):                   # static unroll, tiny N
        z = jnp.dot(w, patches_ref[i],
                    preferred_element_type=jnp.float32) + bias
        z = jnp.maximum(z, 0.0)          # ReLU
        out_ref[i] = z                   # stash pre-BN activations (lane-dense)
        s1 = s1 + jnp.sum(z, axis=1, keepdims=True)
        s2 = s2 + jnp.sum(z * z, axis=1, keepdims=True)

    # BatchNorm1d (training mode): stats over (N, L_out) per channel.
    inv_count = 1.0 / float(n * l_out)
    mean = s1 * inv_count
    var = jnp.maximum(s2 * inv_count - mean * mean, 0.0)   # biased variance
    inv_std = jax.lax.rsqrt(var + 1e-5)
    scale = inv_std * gamma              # (C_out, 1)
    shift = beta - mean * scale          # (C_out, 1)

    # Pass 2: normalize in place.
    for i in range(n):
        out_ref[i] = out_ref[i] * scale + shift
    # TODO(synk): running_mean/running_var buffer updates (a training-mode side
    # effect) are not materialized; they do not affect the forward output.


def convolution_layer_forward(x, weight, bias, gamma, beta, *, stride):
    """x: (N, C_in, L) float32 -> (N, C_out, L_out) float32."""
    n, c_in, length = x.shape
    c_out, _, k = weight.shape
    l_out = (length - k) // stride + 1
    ck = c_in * k

    # --- glue: im2col via K static strided slices (no gather, no transposes) ---
    # tap j: x[:, :, j : j + stride*(l_out-1)+1 : stride] -> (N, C_in, L_out)
    taps = [
        jax.lax.slice(x, (0, 0, j), (n, c_in, j + stride * (l_out - 1) + 1),
                      (1, 1, stride))
        for j in range(k)
    ]
    patches = jnp.stack(taps, axis=2).reshape(n, ck, l_out)   # (N, C_in*K, L_out)

    w_mat = weight.reshape(c_out, ck)                         # (C_out, C_in*K)
    params = jnp.stack([bias, gamma, beta], axis=1)           # (C_out, 3)

    return pl.pallas_call(
        _conv_bn_kernel,
        out_shape=jax.ShapeDtypeStruct((n, c_out, l_out), jnp.float32),
        grid=(1,),
        in_specs=[
            pl.BlockSpec((n, ck, l_out), lambda i: (0, 0, 0)),
            pl.BlockSpec((c_out, ck), lambda i: (0, 0)),
            pl.BlockSpec((c_out, 3), lambda i: (0, 0)),
        ],
        out_specs=pl.BlockSpec((n, c_out, l_out), lambda i: (0, 0, 0)),
        compiler_params=pltpu.CompilerParams(
            dimension_semantics=("arbitrary",)),
    )(patches, w_mat, params)


def _reference(x, weight, bias, gamma, beta, *, stride):
    """Pure-JAX reference matching PyTorch Conv1d+ReLU+BatchNorm1d(train)."""
    z = jax.lax.conv_general_dilated(
        x, weight, window_strides=(stride,), padding="VALID",
        dimension_numbers=("NCH", "OIH", "NCH"))
    z = z + bias[None, :, None]
    z = jnp.maximum(z, 0.0)
    mean = jnp.mean(z, axis=(0, 2), keepdims=True)
    var = jnp.mean((z - mean) ** 2, axis=(0, 2), keepdims=True)
    zn = (z - mean) * jax.lax.rsqrt(var + 1e-5)
    return zn * gamma[None, :, None] + beta[None, :, None]


if __name__ == "__main__":
    # Module hyperparameters (small, consistent with the forward pass).
    N, C_IN, L = 2, 4, 16
    C_OUT, K, STRIDE = 8, 3, 2

    key = jax.random.PRNGKey(0)
    kx, kw, kb = jax.random.split(key, 3)

    x = jax.random.normal(kx, (N, C_IN, L), dtype=jnp.float32)

    # Deterministic parameter init (shapes from nn.Conv1d / nn.BatchNorm1d).
    fan_in = C_IN * K
    bound = 1.0 / jnp.sqrt(fan_in)
    weight = jax.random.uniform(kw, (C_OUT, C_IN, K), jnp.float32, -bound, bound)
    bias = jax.random.uniform(kb, (C_OUT,), jnp.float32, -bound, bound)
    gamma = jnp.ones((C_OUT,), jnp.float32)   # BatchNorm weight
    beta = jnp.zeros((C_OUT,), jnp.float32)   # BatchNorm bias

    fwd = jax.jit(functools.partial(convolution_layer_forward, stride=STRIDE))
    out = fwd(x, weight, bias, gamma, beta)
    jax.block_until_ready(out)

    ref = _reference(x, weight, bias, gamma, beta, stride=STRIDE)
    assert out.shape == (N, C_OUT, (L - K) // STRIDE + 1)
    assert jnp.allclose(out, ref, atol=1e-4, rtol=1e-4)

    print("KERNEL_OK")
</pallas_src>

<mosaic_0001>
module attributes {stable_mosaic.version = 11 : i64} {
  func.func @_conv_bn_kernel(%arg0: i32, %arg1: memref<2x12x7xf32, #tpu.memory_space<vmem>>, %arg2: memref<8x12xf32, #tpu.memory_space<vmem>>, %arg3: memref<8x3xf32, #tpu.memory_space<vmem>>, %arg4: memref<2x8x7xf32, #tpu.memory_space<vmem>>) attributes {dimension_semantics = [#tpu.dimension_semantics<arbitrary>], iteration_bounds = array<i64: 1>, scalar_prefetch = 0 : i64, scratch_operands = 0 : i64, tpu.core_type = #tpu.core_type<tc>, window_params = [{pipeline_mode = #tpu.pipeline_mode<synchronous>, transform_indices = @transform_0, window_bounds = array<i64: 2, 12, 7>}, {pipeline_mode = #tpu.pipeline_mode<synchronous>, transform_indices = @transform_1, window_bounds = array<i64: 8, 12>}, {pipeline_mode = #tpu.pipeline_mode<synchronous>, transform_indices = @transform_2, window_bounds = array<i64: 8, 3>}, {pipeline_mode = #tpu.pipeline_mode<synchronous>, transform_indices = @transform_3, window_bounds = array<i64: 2, 8, 7>}]} {
    %c0 = arith.constant 0 : index
    %c0_0 = arith.constant 0 : index
    %0 = vector.load %arg2[%c0, %c0_0] : memref<8x12xf32, #tpu.memory_space<vmem>>, vector<8x12xf32>
    %c0_1 = arith.constant 0 : index
    %c0_2 = arith.constant 0 : index
    %1 = vector.load %arg3[%c0_1, %c0_2] : memref<8x3xf32, #tpu.memory_space<vmem>>, vector<8x3xf32>
    %2 = vector.extract_strided_slice %1 {offsets = [0, 0], sizes = [8, 1], strides = [1, 1]} : vector<8x3xf32> to vector<8x1xf32>
    %3 = vector.extract_strided_slice %1 {offsets = [0, 1], sizes = [8, 1], strides = [1, 1]} : vector<8x3xf32> to vector<8x1xf32>
    %4 = vector.extract_strided_slice %1 {offsets = [0, 2], sizes = [8, 1], strides = [1, 1]} : vector<8x3xf32> to vector<8x1xf32>
    %cst = arith.constant 0.000000e+00 : f32
    %5 = vector.broadcast %cst : f32 to vector<8x1xf32>
    %cst_3 = arith.constant 0.000000e+00 : f32
    %6 = vector.broadcast %cst_3 : f32 to vector<8x1xf32>
    %c0_4 = arith.constant 0 : index
    %c0_5 = arith.constant 0 : index
    %c0_6 = arith.constant 0 : index
    %7 = vector.load %arg1[%c0_4, %c0_5, %c0_6] : memref<2x12x7xf32, #tpu.memory_space<vmem>>, vector<1x12x7xf32>
    %8 = vector.shape_cast %7 : vector<1x12x7xf32> to vector<12x7xf32>
    %cst_7 = arith.constant dense<0.000000e+00> : vector<8x7xf32>
    %9 = tpu.matmul %0, %8, %cst_7 {dimension_numbers = #tpu.dot_dimension_numbers<[1], [0], [0], [1], [0, 0, 1, 1], [], []>} : vector<8x12xf32>, vector<12x7xf32>, vector<8x7xf32> -> vector<8x7xf32>
    %10 = vector.broadcast %2 : vector<8x1xf32> to vector<8x7xf32>
    %11 = arith.addf %9, %10 : vector<8x7xf32>
    %cst_8 = arith.constant 0.000000e+00 : f32
    %12 = vector.broadcast %cst_8 : f32 to vector<8x7xf32>
    %13 = arith.maximumf %11, %12 : vector<8x7xf32>
    %c0_9 = arith.constant 0 : index
    %c0_10 = arith.constant 0 : index
    %c0_11 = arith.constant 0 : index
    %14 = vector.load %arg4[%c0_9, %c0_10, %c0_11] : memref<2x8x7xf32, #tpu.memory_space<vmem>>, vector<1x8x7xf32>
    %15 = vector.shape_cast %14 : vector<1x8x7xf32> to vector<8x7xf32>
    %16 = vector.shape_cast %13 : vector<8x7xf32> to vector<1x8x7xf32>
    tpu.vector_store %arg4[%c0_9, %c0_10, %c0_11], %16 {strides = array<i32>} : memref<2x8x7xf32, #tpu.memory_space<vmem>>, vector<1x8x7xf32>,
    %cst_12 = arith.constant dense<0.000000e+00> : vector<8xf32>
    %17 = vector.multi_reduction <add>, %13, %cst_12 [1] : vector<8x7xf32> to vector<8xf32>
    %18 = vector.shape_cast %17 : vector<8xf32> to vector<8x1xf32>
    %19 = arith.addf %5, %18 : vector<8x1xf32>
    %20 = arith.mulf %13, %13 : vector<8x7xf32>
    %cst_13 = arith.constant dense<0.000000e+00> : vector<8xf32>
    %21 = vector.multi_reduction <add>, %20, %cst_13 [1] : vector<8x7xf32> to vector<8xf32>
    %22 = vector.shape_cast %21 : vector<8xf32> to vector<8x1xf32>
    %23 = arith.addf %6, %22 : vector<8x1xf32>
    %c1 = arith.constant 1 : index
    %c0_14 = arith.constant 0 : index
    %c0_15 = arith.constant 0 : index
    %24 = vector.load %arg1[%c1, %c0_14, %c0_15] : memref<2x12x7xf32, #tpu.memory_space<vmem>>, vector<1x12x7xf32>
    %25 = vector.shape_cast %24 : vector<1x12x7xf32> to vector<12x7xf32>
    %cst_16 = arith.constant dense<0.000000e+00> : vector<8x7xf32>
    %26 = tpu.matmul %0, %25, %cst_16 {dimension_numbers = #tpu.dot_dimension_numbers<[1], [0], [0], [1], [0, 0, 1, 1], [], []>} : vector<8x12xf32>, vector<12x7xf32>, vector<8x7xf32> -> vector<8x7xf32>
    %27 = vector.broadcast %2 : vector<8x1xf32> to vector<8x7xf32>
    %28 = arith.addf %26, %27 : vector<8x7xf32>
    %cst_17 = arith.constant 0.000000e+00 : f32
    %29 = vector.broadcast %cst_17 : f32 to vector<8x7xf32>
    %30 = arith.maximumf %28, %29 : vector<8x7xf32>
    %c1_18 = arith.constant 1 : index
    %c0_19 = arith.constant 0 : index
    %c0_20 = arith.constant 0 : index
    %31 = vector.load %arg4[%c1_18, %c0_19, %c0_20] : memref<2x8x7xf32, #tpu.memory_space<vmem>>, vector<1x8x7xf32>
    %32 = vector.shape_cast %31 : vector<1x8x7xf32> to vector<8x7xf32>
    %33 = vector.shape_cast %30 : vector<8x7xf32> to vector<1x8x7xf32>
    tpu.vector_store %arg4[%c1_18, %c0_19, %c0_20], %33 {strides = array<i32>} : memref<2x8x7xf32, #tpu.memory_space<vmem>>, vector<1x8x7xf32>,
    %cst_21 = arith.constant dense<0.000000e+00> : vector<8xf32>
    %34 = vector.multi_reduction <add>, %30, %cst_21 [1] : vector<8x7xf32> to vector<8xf32>
    %35 = vector.shape_cast %34 : vector<8xf32> to vector<8x1xf32>
    %36 = arith.addf %19, %35 : vector<8x1xf32>
    %37 = arith.mulf %30, %30 : vector<8x7xf32>
    %cst_22 = arith.constant dense<0.000000e+00> : vector<8xf32>
    %38 = vector.multi_reduction <add>, %37, %cst_22 [1] : vector<8x7xf32> to vector<8xf32>
    %39 = vector.shape_cast %38 : vector<8xf32> to vector<8x1xf32>
    %40 = arith.addf %23, %39 : vector<8x1xf32>
    %cst_23 = arith.constant 0.0714285746 : f32
    %41 = vector.broadcast %cst_23 : f32 to vector<8x1xf32>
    %42 = arith.mulf %36, %41 : vector<8x1xf32>
    %cst_24 = arith.constant 0.0714285746 : f32
    %43 = vector.broadcast %cst_24 : f32 to vector<8x1xf32>
    %44 = arith.mulf %40, %43 : vector<8x1xf32>
    %45 = arith.mulf %42, %42 : vector<8x1xf32>
    %46 = arith.subf %44, %45 : vector<8x1xf32>
    %cst_25 = arith.constant 0.000000e+00 : f32
    %47 = vector.broadcast %cst_25 : f32 to vector<8x1xf32>
    %48 = arith.maximumf %46, %47 : vector<8x1xf32>
    %cst_26 = arith.constant 9.99999974E-6 : f32
    %49 = vector.broadcast %cst_26 : f32 to vector<8x1xf32>
    %50 = arith.addf %48, %49 : vector<8x1xf32>
    %51 = math.rsqrt %50 : vector<8x1xf32>
    %52 = arith.mulf %51, %3 : vector<8x1xf32>
    %53 = arith.mulf %42, %52 : vector<8x1xf32>
    %54 = arith.subf %4, %53 : vector<8x1xf32>
    %c0_27 = arith.constant 0 : index
    %c0_28 = arith.constant 0 : index
    %c0_29 = arith.constant 0 : index
    %55 = vector.load %arg4[%c0_27, %c0_28, %c0_29] : memref<2x8x7xf32, #tpu.memory_space<vmem>>, vector<1x8x7xf32>
    %56 = vector.shape_cast %55 : vector<1x8x7xf32> to vector<8x7xf32>
    %57 = vector.broadcast %52 : vector<8x1xf32> to vector<8x7xf32>
    %58 = arith.mulf %56, %57 : vector<8x7xf32>
    %59 = vector.broadcast %54 : vector<8x1xf32> to vector<8x7xf32>
    %60 = arith.addf %58, %59 : vector<8x7xf32>
    %c0_30 = arith.constant 0 : index
    %c0_31 = arith.constant 0 : index
    %c0_32 = arith.constant 0 : index
    %61 = vector.load %arg4[%c0_30, %c0_31, %c0_32] : memref<2x8x7xf32, #tpu.memory_space<vmem>>, vector<1x8x7xf32>
    %62 = vector.shape_cast %61 : vector<1x8x7xf32> to vector<8x7xf32>
    %63 = vector.shape_cast %60 : vector<8x7xf32> to vector<1x8x7xf32>
    tpu.vector_store %arg4[%c0_30, %c0_31, %c0_32], %63 {strides = array<i32>} : memref<2x8x7xf32, #tpu.memory_space<vmem>>, vector<1x8x7xf32>,
    %c1_33 = arith.constant 1 : index
    %c0_34 = arith.constant 0 : index
    %c0_35 = arith.constant 0 : index
    %64 = vector.load %arg4[%c1_33, %c0_34, %c0_35] : memref<2x8x7xf32, #tpu.memory_space<vmem>>, vector<1x8x7xf32>
    %65 = vector.shape_cast %64 : vector<1x8x7xf32> to vector<8x7xf32>
    %66 = vector.broadcast %52 : vector<8x1xf32> to vector<8x7xf32>
    %67 = arith.mulf %65, %66 : vector<8x7xf32>
    %68 = vector.broadcast %54 : vector<8x1xf32> to vector<8x7xf32>
    %69 = arith.addf %67, %68 : vector<8x7xf32>
    %c1_36 = arith.constant 1 : index
    %c0_37 = arith.constant 0 : index
    %c0_38 = arith.constant 0 : index
    %70 = vector.load %arg4[%c1_36, %c0_37, %c0_38] : memref<2x8x7xf32, #tpu.memory_space<vmem>>, vector<1x8x7xf32>
    %71 = vector.shape_cast %70 : vector<1x8x7xf32> to vector<8x7xf32>
    %72 = vector.shape_cast %69 : vector<8x7xf32> to vector<1x8x7xf32>
    tpu.vector_store %arg4[%c1_36, %c0_37, %c0_38], %72 {strides = array<i32>} : memref<2x8x7xf32, #tpu.memory_space<vmem>>, vector<1x8x7xf32>,
    return
  }
  func.func @transform_0(%arg0: i32) -> (i32, i32, i32) {
    %c0_i32 = arith.constant 0 : i32
    %c0_i32_0 = arith.constant 0 : i32
    %c0_i32_1 = arith.constant 0 : i32
    %c0_i32_2 = arith.constant 0 : i32
    return %c0_i32, %c0_i32_0, %c0_i32_1 : i32, i32, i32
  }
  func.func @transform_1(%arg0: i32) -> (i32, i32) {
    %c0_i32 = arith.constant 0 : i32
    %c0_i32_0 = arith.constant 0 : i32
    %c0_i32_1 = arith.constant 0 : i32
    return %c0_i32, %c0_i32_0 : i32, i32
  }
  func.func @transform_2(%arg0: i32) -> (i32, i32) {
    %c0_i32 = arith.constant 0 : i32
    %c0_i32_0 = arith.constant 0 : i32
    %c0_i32_1 = arith.constant 0 : i32
    return %c0_i32, %c0_i32_0 : i32, i32
  }
  func.func @transform_3(%arg0: i32) -> (i32, i32, i32) {
    %c0_i32 = arith.constant 0 : i32
    %c0_i32_0 = arith.constant 0 : i32
    %c0_i32_1 = arith.constant 0 : i32
    %c0_i32_2 = arith.constant 0 : i32
    return %c0_i32, %c0_i32_0, %c0_i32_1 : i32, i32, i32
  }
}

</mosaic_0001>

<llo_original>
// kernel: convolution_layer_forward.1
$region0: #{convolution_layer_forward.1}
  #allocation0 [shape = 'u32[]', space=smem, size = 0x4, offset = 0x4, fixed_abs, tag = 'smem constant byte address 0x4 - core index']
  #allocation1 [shape = 'u32[144,128]{1,0:T(1,128)}', space=vmem, size = 0x12000, scoped, tag = 'internal scratch']
  %s0 = inlined_call_operand.vmem [shape: f32[2,12,7], index: 0, kind: input, shape index: {}]
  %s1 = inlined_call_operand.vmem [shape: f32[8,12], index: 1, kind: input, shape index: {}]
  %s2 = inlined_call_operand.vmem [shape: f32[8,3], index: 2, kind: input, shape index: {}]
  %s3 = inlined_call_operand.vmem [shape: f32[2,8,7], index: 3, kind: output, shape index: {}]
  %s4 = sld [smem:[#allocation0]]
  $region22: #{convolution_layer_forward.1} parent=0
    _
  %s6 = ssub.s32 1, %s4
  %s7 = scalar_select 0, %s6, %s4
  // Predicated region
  $region2: #{convolution_layer_forward.1} parent=0 // pred_check
    _
  $region3: #{convolution_layer_forward.1} parent=0 // pred_check_branch
    %9 = sbr.rel (0) target = $region5
  $region4: #{convolution_layer_forward.1} parent=0 // pred_region
    _
  $region5: #{convolution_layer_forward.1} parent=0 // pred_fallthru
    _
  // Predicated region
  $region6: #{convolution_layer_forward.1} parent=0 // pred_check
    _
  $region7: #{convolution_layer_forward.1} parent=0 // pred_check_branch
    %11 = sbr.rel (0) target = $region9
  $region8: #{convolution_layer_forward.1} parent=0 // pred_region
    _
  $region9: #{convolution_layer_forward.1} parent=0 // pred_fallthru
    _
  // Predicated region
  $region10: #{convolution_layer_forward.1} parent=0 // pred_check
    _
  $region11: #{convolution_layer_forward.1} parent=0 // pred_check_branch
    %13 = sbr.rel (0) target = $region13
  $region12: #{convolution_layer_forward.1} parent=0 // pred_region
    _
  $region13: #{convolution_layer_forward.1} parent=0 // pred_fallthru
    _
  %v14 = vld [vmem:[%s1] sm:$0xff]
  %v15 = vld [vmem:[%s2] sm:$0xff]
  %v16 = vld [vmem:[%s0] sm:$0xff]
  %v17 = vld [vmem:[%s0 + $0x8] sm:$0xf]
  %19 = vset.pattern.permute.xlu0 0
  %20 = vperm.xlu0 %19, %v15
  %v21 = vpop.permute.xlu0 %20
  %vm23 = vcmask 97280
  %v25 = vsel %vm23, %v14, 0
  %vm27 = vcmask 1043456
  %v29 = vsel %vm27, %v17, 0
  %31 = vmatprep.subr.mxu0 0.0
  %32 = vmatpush1.msra.mxu0 %v16
  %33 = vmatprep.subr.mxu0 0.0
  %34 = vmatpush1.msra.mxu0 %v29
  %35 = vmatprep.subr.mxu0 0.0
  %36 = vmatpush1.msra.mxu0 0.0
  %37 = vmatprep.subr.mxu0 0.0
  %38 = vmatpush1.msra.mxu0 0.0
  %39 = vmatprep.subr.mxu0 0.0
  %40 = vmatpush1.msra.mxu0 0.0
  %41 = vmatprep.subr.mxu0 0.0
  %42 = vmatpush1.msra.mxu0 0.0
  %43 = vmatprep.subr.mxu0 0.0
  %44 = vmatpush1.msra.mxu0 0.0
  %45 = vmatprep.subr.mxu0 0.0
  %46 = vmatpush1.msra.mxu0 0.0
  %47 = vmatprep.subr.mxu0 0.0
  %48 = vmatpush1.msra.mxu0 0.0
  %49 = vmatprep.subr.mxu0 0.0
  %50 = vmatpush1.msra.mxu0 0.0
  %51 = vmatprep.subr.mxu0 0.0
  %52 = vmatpush1.msra.mxu0 0.0
  %53 = vmatprep.subr.mxu0 0.0
  %54 = vmatpush1.msra.mxu0 0.0
  %55 = vmatprep.subr.mxu0 0.0
  %56 = vmatpush1.msra.mxu0 0.0
  %57 = vmatprep.subr.mxu0 0.0
  %58 = vmatpush1.msra.mxu0 0.0
  %59 = vmatprep.subr.mxu0 0.0
  %60 = vmatpush1.msra.mxu0 0.0
  %61 = vmatprep.subr.mxu0 0.0
  %62 = vmatpush1.msra.mxu0 0.0
  %63 = vmatprep.subr.mxu0 0.0
  %64 = vmatpush1.msra.mxu0 0.0
  %65 = vmatprep.subr.mxu0 0.0
  %66 = vmatpush1.msra.mxu0 0.0
  %67 = vmatprep.subr.mxu0 0.0
  %68 = vmatpush1.msra.mxu0 0.0
  %69 = vmatprep.subr.mxu0 0.0
  %70 = vmatpush1.msra.mxu0 0.0
  %71 = vmatprep.subr.mxu0 0.0
  %72 = vmatpush1.msra.mxu0 0.0
  %73 = vmatprep.subr.mxu0 0.0
  %74 = vmatpush1.msra.mxu0 0.0
  %75 = vmatprep.subr.mxu0 0.0
  %76 = vmatpush1.msra.mxu0 0.0
  %77 = vmatprep.subr.mxu0 0.0
  %78 = vmatpush1.msra.mxu0 0.0
  %79 = vmatprep.subr.mxu0 0.0
  %80 = vmatpush1.msra.mxu0 0.0
  %81 = vmatprep.subr.mxu0 0.0
  %82 = vmatpush1.msra.mxu0 0.0
  %83 = vmatprep.subr.mxu0 0.0
  %84 = vmatpush1.msra.mxu0 0.0
  %85 = vmatprep.subr.mxu0 0.0
  %86 = vmatpush1.msra.mxu0 0.0
  %87 = vmatprep.subr.mxu0 0.0
  %88 = vmatpush1.msra.mxu0 0.0
  %89 = vmatprep.subr.mxu0 0.0
  %90 = vmatpush1.msra.mxu0 0.0
  %91 = vmatprep.subr.mxu0 0.0
  %92 = vmatpush1.msra.mxu0 0.0
  %93 = vmatprep.subr.mxu0 0.0
  %94 = vmatpush1.msra.mxu0 0.0
  %95 = vmatprep.mubr.f32.mxu0 0.0
  %96 = vmatmul.mubr.f32.gmra.mrb[0].mxu0 %v25
  %v97 = vpop.f32.mrb[0].mxu0
  %v98 = vadd.f32 %v21, %v97
  %v99 = vpop.f32.mrb[0].mxu0
  %100 = vdwg.mxu0
  %v101 = vmax.f32 %v98, 0.0
  %vm102 = vcmask 56320
  %103 = vst.msk [vmem:[%s3] sm:$0xff] %vm102, %v101
  %v104 = vsel %vm102, %v101, 0.0
  %105 = vadd.xlane.f32.xlu0 %v104
  %v106 = vpop.xlane.xlu0 %105
  %v107 = vadd.f32 %v106, 0.0
  %v108 = vmul.f32 %v101, %v101
  %v109 = vsel %vm102, %v108, 0.0
  %110 = vadd.xlane.f32.xlu0 %v109
  %v111 = vpop.xlane.xlu0 %110
  %v112 = vadd.f32 %v111, 0.0
  %s113 = scalar_lea.vmem %s0, 16
  %v114 = vld [vmem:[%s113] sm:$0xff]
  %v115 = vld [vmem:[%s113 + $0x8] sm:$0xf]
  %v117 = vsel %vm27, %v115, 0
  %119 = vmatprep.subr.mxu0 0.0
  %120 = vmatpush1.msra.mxu0 %v114
  %121 = vmatprep.subr.mxu0 0.0
  %122 = vmatpush1.msra.mxu0 %v117
  %123 = vmatprep.subr.mxu0 0.0
  %124 = vmatpush1.msra.mxu0 0.0
  %125 = vmatprep.subr.mxu0 0.0
  %126 = vmatpush1.msra.mxu0 0.0
  %127 = vmatprep.subr.mxu0 0.0
  %128 = vmatpush1.msra.mxu0 0.0
  %129 = vmatprep.subr.mxu0 0.0
  %130 = vmatpush1.msra.mxu0 0.0
  %131 = vmatprep.subr.mxu0 0.0
  %132 = vmatpush1.msra.mxu0 0.0
  %133 = vmatprep.subr.mxu0 0.0
  %134 = vmatpush1.msra.mxu0 0.0
  %135 = vmatprep.subr.mxu0 0.0
  %136 = vmatpush1.msra.mxu0 0.0
  %137 = vmatprep.subr.mxu0 0.0
  %138 = vmatpush1.msra.mxu0 0.0
  %139 = vmatprep.subr.mxu0 0.0
  %140 = vmatpush1.msra.mxu0 0.0
  %141 = vmatprep.subr.mxu0 0.0
  %142 = vmatpush1.msra.mxu0 0.0
  %143 = vmatprep.subr.mxu0 0.0
  %144 = vmatpush1.msra.mxu0 0.0
  %145 = vmatprep.subr.mxu0 0.0
  %146 = vmatpush1.msra.mxu0 0.0
  %147 = vmatprep.subr.mxu0 0.0
  %148 = vmatpush1.msra.mxu0 0.0
  %149 = vmatprep.subr.mxu0 0.0
  %150 = vmatpush1.msra.mxu0 0.0
  %151 = vmatprep.subr.mxu0 0.0
  %152 = vmatpush1.msra.mxu0 0.0
  %153 = vmatprep.subr.mxu0 0.0
  %154 = vmatpush1.msra.mxu0 0.0
  %155 = vmatprep.subr.mxu0 0.0
  %156 = vmatpush1.msra.mxu0 0.0
  %157 = vmatprep.subr.mxu0 0.0
  %158 = vmatpush1.msra.mxu0 0.0
  %159 = vmatprep.subr.mxu0 0.0
  %160 = vmatpush1.msra.mxu0 0.0
  %161 = vmatprep.subr.mxu0 0.0
  %162 = vmatpush1.msra.mxu0 0.0
  %163 = vmatprep.subr.mxu0 0.0
  %164 = vmatpush1.msra.mxu0 0.0
  %165 = vmatprep.subr.mxu0 0.0
  %166 = vmatpush1.msra.mxu0 0.0
  %167 = vmatprep.subr.mxu0 0.0
  %168 = vmatpush1.msra.mxu0 0.0
  %169 = vmatprep.subr.mxu0 0.0
  %170 = vmatpush1.msra.mxu0 0.0
  %171 = vmatprep.subr.mxu0 0.0
  %172 = vmatpush1.msra.mxu0 0.0
  %173 = vmatprep.subr.mxu0 0.0
  %174 = vmatpush1.msra.mxu0 0.0
  %175 = vmatprep.subr.mxu0 0.0
  %176 = vmatpush1.msra.mxu0 0.0
  %177 = vmatprep.subr.mxu0 0.0
  %178 = vmatpush1.msra.mxu0 0.0
  %179 = vmatprep.subr.mxu0 0.0
  %180 = vmatpush1.msra.mxu0 0.0
  %181 = vmatprep.subr.mxu0 0.0
  %182 = vmatpush1.msra.mxu0 0.0
  %183 = vmatprep.mubr.f32.mxu0 0.0
  %184 = vmatmul.mubr.f32.gmra.mrb[0].mxu0 %v25
  %v185 = vpop.f32.mrb[0].mxu0
  %v186 = vadd.f32 %v21, %v185
  %v187 = vpop.f32.mrb[0].mxu0
  %188 = vdwg.mxu0
  %v189 = vmax.f32 %v186, 0.0
  %s190 = scalar_lea.vmem %s3, 8
  %191 = vst.msk [vmem:[%s190] sm:$0xff] %vm102, %v189
  %v192 = vsel %vm102, %v189, 0.0
  %193 = vadd.xlane.f32.xlu0 %v192
  %v194 = vpop.xlane.xlu0 %193
  %v195 = vadd.f32 %v107, %v194
  %v196 = vmul.f32 %v189, %v189
  %v197 = vsel %vm102, %v196, 0.0
  %198 = vadd.xlane.f32.xlu0 %v197
  %v199 = vpop.xlane.xlu0 %198
  %v200 = vadd.f32 %v112, %v199
  %v201 = vmul.f32 %v195, 0.071428575
  %v202 = vmul.f32 %v200, 0.071428575
  %v203 = vmul.f32 %v201, %v201
  %v204 = vsub.f32 %v202, %v203
  %v205 = vmax.f32 %v204, 0.0
  %v206 = vadd.f32 %v205, 1e-05
  %v207 = vrsqrt.pop %v206
  %v208 = vmul.f32 %v207, %v15
  %v209 = vmul.f32 %v201, %v208
  %211 = vrot.lane.b32.xlu0 %v209, 1
  %v212 = vpop.permute.xlu0 %211
  %v214 = vsub.f32 %v15, %v212
  %v215 = vld [vmem:[%s3] sm:$0xff]
  %217 = vset.pattern.permute.xlu0 1
  %218 = vperm.xlu0 %217, %v208
  %v219 = vpop.permute.xlu0 %218
  %v221 = vmul.f32 %v215, %v219
  %223 = vset.pattern.permute.xlu0 2
  %224 = vperm.xlu0 %223, %v214
  %v225 = vpop.permute.xlu0 %224
  %v227 = vadd.f32 %v221, %v225
  %228 = vst.msk [vmem:[%s3] sm:$0xff] %vm102, %v227
  %v229 = vld [vmem:[%s190] sm:$0xff]
  %v230 = vmul.f32 %v229, %v219
  %v231 = vadd.f32 %v230, %v225
  %232 = vst.msk [vmem:[%s190] sm:$0xff] %vm102, %v231
  // Predicated region
  $region14: #{convolution_layer_forward.1} parent=0 // pred_check
    _
  $region15: #{convolution_layer_forward.1} parent=0 // pred_check_branch
    %234 = sbr.rel (0) target = $region17
  $region16: #{convolution_layer_forward.1} parent=0 // pred_region
    _
  $region17: #{convolution_layer_forward.1} parent=0 // pred_fallthru
    _
  // Predicated region
  $region18: #{convolution_layer_forward.1} parent=0 // pred_check
    _
  $region19: #{convolution_layer_forward.1} parent=0 // pred_check_branch
    %236 = sbr.rel (0) target = $region21
  $region20: #{convolution_layer_forward.1} parent=0 // pred_region
    _
  $region21: #{convolution_layer_forward.1} parent=0 // pred_fallthru
    _

</llo_original>
